<compile_context>
chip_gen: v7x
topology: tpu7x:2x2x1
jax: 0.10.0
libtpu: 0.0.40
codegen_flags: <defaults>
</compile_context>

<pallas_src>
import jax
import jax.numpy as jnp
from jax.experimental import pallas as pl
from jax.experimental.pallas import tpu as pltpu


# ----------------------------------------------------------------------------
# Helpers
# ----------------------------------------------------------------------------
def _bin_edges(size, level, idx):
    """PyTorch adaptive_max_pool2d bin: [floor(i*size/level), ceil((i+1)*size/level))."""
    start = (idx * size) // level
    end = -(-((idx + 1) * size) // level)  # ceil division
    return start, end


def _level_offsets(levels):
    offs, off = [], 0
    for l in levels:
        offs.append(off)
        off += l * l
    return offs, off


def _round_up(x, m):
    return -(-x // m) * m


def _vmem_budgets():
    """(per-input-block budget, scoped vmem limit), gated per TPU generation."""
    try:
        cap = int(pltpu.get_tpu_info().vmem_capacity_bytes)
    except Exception:
        cap = 64 * 1024 * 1024  # conservative: v7x per-TensorCore VMEM
    return cap // 8, cap // 2


def _pick_channel_tile(c, bs, h, w, itemsize, block_budget):
    """Choose (c_eff, tc): channel count after optional lane padding plus the
    lane-tile width.  tc is a lane-dense multiple of 128 unless the whole
    (unaligned) channel dim fits one block, in which case tc == c."""
    bytes_per_lane = h * w * itemsize
    max_lanes = max(1, block_budget // bytes_per_lane)

    if c % 128 != 0 and c * bytes_per_lane <= block_budget:
        # Small / unaligned channel count: one full-dim block, no padding,
        # no extra HBM traffic (masked stores are negligible at this size).
        return c, c

    c_eff = _round_up(c, 128)  # padded lanes can never contaminate a per-lane max
    cands = [t for t in (2048, 1024, 512, 256, 128)
             if c_eff % t == 0 and t <= max_lanes]
    if bs == 1:
        # v7x has 2 TensorCores: keep >= 2 parallel grid steps when the batch
        # axis alone cannot feed both cores.
        pref = [t for t in cands if c_eff // t >= 2]
        cands = pref or cands
    tc = cands[0] if cands else 128
    # TODO(synk): for huge h*w where even a 128-lane block overflows the VMEM
    # budget, stream row bands over a second "arbitrary" grid axis with a
    # running row-max accumulator instead of one (h, w, tc) block.
    return c_eff, tc


def _compiler_params(vmem_limit, fuse_input):
    kwargs = dict(dimension_semantics=("parallel", "parallel"),
                  vmem_limit_bytes=int(vmem_limit))
    if fuse_input:
        try:
            # Let XLA fold the producer (the NCHW->NHWC transpose) into the
            # kernel's input DMA instead of a separate HBM round-trip.
            return pltpu.CompilerParams(allow_input_fusion=[True], **kwargs)
        except TypeError:
            pass
    return pltpu.CompilerParams(**kwargs)


# ----------------------------------------------------------------------------
# Kernel
# ----------------------------------------------------------------------------
def make_spp_kernel(levels, h, w):
    levels = tuple(int(l) for l in levels)
    max_l = max(levels)
    fine_idx = levels.index(max_l)
    offs, _ = _level_offsets(levels)
    fine_off = offs[fine_idx]
    nest_ok = (h % max_l == 0) and (w % max_l == 0)

    def kernel(x_ref, o_ref):
        # x_ref: (1, h, w, tc) VMEM block (lanes = channel tile).
        # o_ref: (1, total_bins, tc) lane-dense output block.

        def row_reduce(r0, r1):
            # Elementwise (VPU) max over rows r0..r1-1 -> (w, tc).
            acc = x_ref[0, r0]
            for r in range(r0 + 1, r1):
                acc = jnp.maximum(acc, x_ref[0, r])
            return acc

        def direct_level(level, lvl_off):
            # Exact adaptive_max_pool2d floor/ceil bins; each bin row is
            # stored as soon as it is produced (tiny live register set).
            for i in range(level):
                r0, r1 = _bin_edges(h, level, i)
                rowred = row_reduce(r0, r1)                       # (w, tc)
                for j in range(level):
                    c0, c1 = _bin_edges(w, level, j)
                    o_ref[0, lvl_off + i * level + j, :] = jnp.max(
                        rowred[c0:c1, :], axis=0)

        # 1) Finest level: bulk of the work (full-width VPU row maxima + one
        #    small sublane reduce per bin), written straight to its rows.
        direct_level(max_l, fine_off)

        # 2) Remaining levels.
        for k, level in enumerate(levels):
            if k == fine_idx:
                continue
            if nest_ok and max_l % level == 0:
                # Derive from the finest-level rows already packed in o_ref.
                s = max_l // level
                for i in range(level):
                    for j in range(level):
                        acc = o_ref[0, fine_off + (i * s) * max_l + (j * s), :]
                        for di in range(s):
                            for dj in range(s):
                                if di == 0 and dj == 0:
                                    continue
                                row = fine_off + (i * s + di) * max_l + (j * s + dj)
                                acc = jnp.maximum(acc, o_ref[0, row, :])
                        o_ref[0, offs[k] + i * level + j, :] = acc
            else:
                direct_level(level, offs[k])

    return kernel


# ----------------------------------------------------------------------------
# Wrappers
# ----------------------------------------------------------------------------
def spp_layer_nhwc(x, levels=(1, 2, 4), *, fuse_input=False):
    """SPP on an NHWC feature map (TPU-native, no relayout).
    x: (bs, h, w, c).  Returns (bs, c * sum(l*l)) in PyTorch ordering."""
    bs, h, w, c = x.shape
    levels = tuple(int(l) for l in levels)
    offs, total_bins = _level_offsets(levels)

    block_budget, vmem_limit = _vmem_budgets()
    c_eff, tc = _pick_channel_tile(c, bs, h, w, x.dtype.itemsize, block_budget)
    if c_eff != c:
        x = jnp.pad(x, ((0, 0), (0, 0), (0, 0), (0, c_eff - c)))

    grid = (bs, c_eff // tc)

    cost = pl.CostEstimate(
        flops=int(bs * c_eff * h * w * len(levels)),
        transcendentals=0,
        bytes_accessed=int((bs * h * w * c_eff + bs * total_bins * c_eff)
                           * x.dtype.itemsize),
    )

    out = pl.pallas_call(
        make_spp_kernel(levels, h, w),
        out_shape=jax.ShapeDtypeStruct((bs, total_bins, c_eff), x.dtype),
        grid=grid,
        in_specs=[pl.BlockSpec((1, h, w, tc), lambda b, ci: (b, 0, 0, ci))],
        out_specs=pl.BlockSpec((1, total_bins, tc), lambda b, ci: (b, 0, ci)),
        compiler_params=_compiler_params(vmem_limit, fuse_input),
        cost_estimate=cost,
    )(x)

    out = out[:, :, :c]  # drop padded lanes (if any)

    # PyTorch ordering: per level (bs, c, level, level).view(bs, -1), then cat.
    parts = []
    for k, lvl in enumerate(levels):
        nb = lvl * lvl
        seg = out[:, offs[k]:offs[k] + nb, :]                  # (bs, nb, c)
        parts.append(jnp.transpose(seg, (0, 2, 1)).reshape(bs, c * nb))
    return jnp.concatenate(parts, axis=1)


def spp_layer(x, levels=(1, 2, 4)):
    """PyTorch-module entry point: x is NCHW (bs, c, h, w)."""
    # Single relayout to the TPU-native NHWC kernel; allow_input_fusion lets
    # XLA fold it into the kernel's input DMA.  If the upstream convs already
    # produce NHWC, call spp_layer_nhwc directly and skip this entirely.
    x_nhwc = jnp.transpose(x, (0, 2, 3, 1))
    return spp_layer_nhwc(x_nhwc, levels, fuse_input=True)


# ----------------------------------------------------------------------------
# Pure-JAX reference (F.adaptive_max_pool2d + flatten + concat, NCHW)
# ----------------------------------------------------------------------------
def _spp_reference(x, levels=(1, 2, 4)):
    bs, c, h, w = x.shape
    parts = []
    for level in levels:
        pooled = jnp.zeros((bs, c, level, level), x.dtype)
        for i in range(level):
            r0, r1 = _bin_edges(h, level, i)
            for j in range(level):
                c0, c1 = _bin_edges(w, level, j)
                pooled = pooled.at[:, :, i, j].set(
                    jnp.max(x[:, :, r0:r1, c0:c1], axis=(2, 3)))
        parts.append(pooled.reshape(bs, -1))
    return jnp.concatenate(parts, axis=1)


# ----------------------------------------------------------------------------
# Self-test
# ----------------------------------------------------------------------------
if __name__ == "__main__":
    key = jax.random.PRNGKey(0)
    bs, c, h, w = 2, 4, 16, 16
    levels = (1, 2, 4)           # typical SPP pyramid for VGG16_SPP

    x = jax.random.normal(key, (bs, c, h, w), dtype=jnp.float32)

    # NCHW entry point (matches the PyTorch module forward).
    out = jax.block_until_ready(spp_layer(x, levels))
    ref = _spp_reference(x, levels)
    assert out.shape == (bs, c * sum(l * l for l in levels)), out.shape
    assert jnp.allclose(out, ref), "NCHW SPP mismatch vs reference"

    # NHWC fast path (no relayout anywhere).
    x_nhwc = jnp.transpose(x, (0, 2, 3, 1))
    out_nhwc = jax.block_until_ready(spp_layer_nhwc(x_nhwc, levels))
    assert jnp.allclose(out_nhwc, ref), "NHWC SPP mismatch vs reference"

    # Non-nesting spatial size exercises the exact floor/ceil fallback bins.
    x_odd = jax.random.normal(jax.random.PRNGKey(1), (2, 4, 15, 13), jnp.float32)
    assert jnp.allclose(spp_layer(x_odd, (1, 2, 3)),
                        _spp_reference(x_odd, (1, 2, 3))), "fallback mismatch"

    # bf16: memory-bound op, halving bytes halves wall time; max is exact.
    x_bf16 = x.astype(jnp.bfloat16)
    assert jnp.array_equal(spp_layer(x_bf16, levels),
                           _spp_reference(x_bf16, levels)), "bf16 mismatch"

    print("KERNEL_OK")
</pallas_src>

<mosaic_0001>
module attributes {stable_mosaic.version = 11 : i64} {
  func.func @kernel(%arg0: i32, %arg1: i32, %arg2: memref<1x16x16x4xf32, #tpu.memory_space<vmem>>, %arg3: memref<1x21x4xf32, #tpu.memory_space<vmem>>) attributes {dimension_semantics = [#tpu.dimension_semantics<parallel>, #tpu.dimension_semantics<parallel>], iteration_bounds = array<i64: 2, 1>, scalar_prefetch = 0 : i64, scratch_operands = 0 : i64, tpu.core_type = #tpu.core_type<tc>, window_params = [{transform_indices = @transform_0, window_bounds = array<i64: 1, 16, 16, 4>}, {transform_indices = @transform_1, window_bounds = array<i64: 1, 21, 4>}]} {
    %c0 = arith.constant 0 : index
    %c0_0 = arith.constant 0 : index
    %c0_1 = arith.constant 0 : index
    %c0_2 = arith.constant 0 : index
    %0 = vector.load %arg2[%c0, %c0_0, %c0_1, %c0_2] : memref<1x16x16x4xf32, #tpu.memory_space<vmem>>, vector<1x1x16x4xf32>
    %1 = vector.shape_cast %0 : vector<1x1x16x4xf32> to vector<16x4xf32>
    %c0_3 = arith.constant 0 : index
    %c1 = arith.constant 1 : index
    %c0_4 = arith.constant 0 : index
    %c0_5 = arith.constant 0 : index
    %2 = vector.load %arg2[%c0_3, %c1, %c0_4, %c0_5] : memref<1x16x16x4xf32, #tpu.memory_space<vmem>>, vector<1x1x16x4xf32>
    %3 = vector.shape_cast %2 : vector<1x1x16x4xf32> to vector<16x4xf32>
    %4 = arith.maximumf %1, %3 : vector<16x4xf32>
    %c0_6 = arith.constant 0 : index
    %c2 = arith.constant 2 : index
    %c0_7 = arith.constant 0 : index
    %c0_8 = arith.constant 0 : index
    %5 = vector.load %arg2[%c0_6, %c2, %c0_7, %c0_8] : memref<1x16x16x4xf32, #tpu.memory_space<vmem>>, vector<1x1x16x4xf32>
    %6 = vector.shape_cast %5 : vector<1x1x16x4xf32> to vector<16x4xf32>
    %7 = arith.maximumf %4, %6 : vector<16x4xf32>
    %c0_9 = arith.constant 0 : index
    %c3 = arith.constant 3 : index
    %c0_10 = arith.constant 0 : index
    %c0_11 = arith.constant 0 : index
    %8 = vector.load %arg2[%c0_9, %c3, %c0_10, %c0_11] : memref<1x16x16x4xf32, #tpu.memory_space<vmem>>, vector<1x1x16x4xf32>
    %9 = vector.shape_cast %8 : vector<1x1x16x4xf32> to vector<16x4xf32>
    %10 = arith.maximumf %7, %9 : vector<16x4xf32>
    %11 = vector.extract_strided_slice %10 {offsets = [0, 0], sizes = [4, 4], strides = [1, 1]} : vector<16x4xf32> to vector<4x4xf32>
    %cst = arith.constant dense<0xFF800000> : vector<4xf32>
    %12 = vector.multi_reduction <maximumf>, %11, %cst [0] : vector<4x4xf32> to vector<4xf32>
    %c0_12 = arith.constant 0 : index
    %c5 = arith.constant 5 : index
    %c0_13 = arith.constant 0 : index
    %13 = vector.load %arg3[%c0_12, %c5, %c0_13] : memref<1x21x4xf32, #tpu.memory_space<vmem>>, vector<1x1x4xf32>
    %14 = vector.shape_cast %13 : vector<1x1x4xf32> to vector<4xf32>
    %15 = vector.shape_cast %12 : vector<4xf32> to vector<1x1x4xf32>
    tpu.vector_store %arg3[%c0_12, %c5, %c0_13], %15 {strides = array<i32>} : memref<1x21x4xf32, #tpu.memory_space<vmem>>, vector<1x1x4xf32>,
    %16 = vector.extract_strided_slice %10 {offsets = [4, 0], sizes = [4, 4], strides = [1, 1]} : vector<16x4xf32> to vector<4x4xf32>
    %cst_14 = arith.constant dense<0xFF800000> : vector<4xf32>
    %17 = vector.multi_reduction <maximumf>, %16, %cst_14 [0] : vector<4x4xf32> to vector<4xf32>
    %c0_15 = arith.constant 0 : index
    %c6 = arith.constant 6 : index
    %c0_16 = arith.constant 0 : index
    %18 = vector.load %arg3[%c0_15, %c6, %c0_16] : memref<1x21x4xf32, #tpu.memory_space<vmem>>, vector<1x1x4xf32>
    %19 = vector.shape_cast %18 : vector<1x1x4xf32> to vector<4xf32>
    %20 = vector.shape_cast %17 : vector<4xf32> to vector<1x1x4xf32>
    tpu.vector_store %arg3[%c0_15, %c6, %c0_16], %20 {strides = array<i32>} : memref<1x21x4xf32, #tpu.memory_space<vmem>>, vector<1x1x4xf32>,
    %21 = vector.extract_strided_slice %10 {offsets = [8, 0], sizes = [4, 4], strides = [1, 1]} : vector<16x4xf32> to vector<4x4xf32>
    %cst_17 = arith.constant dense<0xFF800000> : vector<4xf32>
    %22 = vector.multi_reduction <maximumf>, %21, %cst_17 [0] : vector<4x4xf32> to vector<4xf32>
    %c0_18 = arith.constant 0 : index
    %c7 = arith.constant 7 : index
    %c0_19 = arith.constant 0 : index
    %23 = vector.load %arg3[%c0_18, %c7, %c0_19] : memref<1x21x4xf32, #tpu.memory_space<vmem>>, vector<1x1x4xf32>
    %24 = vector.shape_cast %23 : vector<1x1x4xf32> to vector<4xf32>
    %25 = vector.shape_cast %22 : vector<4xf32> to vector<1x1x4xf32>
    tpu.vector_store %arg3[%c0_18, %c7, %c0_19], %25 {strides = array<i32>} : memref<1x21x4xf32, #tpu.memory_space<vmem>>, vector<1x1x4xf32>,
    %26 = vector.extract_strided_slice %10 {offsets = [12, 0], sizes = [4, 4], strides = [1, 1]} : vector<16x4xf32> to vector<4x4xf32>
    %cst_20 = arith.constant dense<0xFF800000> : vector<4xf32>
    %27 = vector.multi_reduction <maximumf>, %26, %cst_20 [0] : vector<4x4xf32> to vector<4xf32>
    %c0_21 = arith.constant 0 : index
    %c8 = arith.constant 8 : index
    %c0_22 = arith.constant 0 : index
    %28 = vector.load %arg3[%c0_21, %c8, %c0_22] : memref<1x21x4xf32, #tpu.memory_space<vmem>>, vector<1x1x4xf32>
    %29 = vector.shape_cast %28 : vector<1x1x4xf32> to vector<4xf32>
    %30 = vector.shape_cast %27 : vector<4xf32> to vector<1x1x4xf32>
    tpu.vector_store %arg3[%c0_21, %c8, %c0_22], %30 {strides = array<i32>} : memref<1x21x4xf32, #tpu.memory_space<vmem>>, vector<1x1x4xf32>,
    %c0_23 = arith.constant 0 : index
    %c4 = arith.constant 4 : index
    %c0_24 = arith.constant 0 : index
    %c0_25 = arith.constant 0 : index
    %31 = vector.load %arg2[%c0_23, %c4, %c0_24, %c0_25] : memref<1x16x16x4xf32, #tpu.memory_space<vmem>>, vector<1x1x16x4xf32>
    %32 = vector.shape_cast %31 : vector<1x1x16x4xf32> to vector<16x4xf32>
    %c0_26 = arith.constant 0 : index
    %c5_27 = arith.constant 5 : index
    %c0_28 = arith.constant 0 : index
    %c0_29 = arith.constant 0 : index
    %33 = vector.load %arg2[%c0_26, %c5_27, %c0_28, %c0_29] : memref<1x16x16x4xf32, #tpu.memory_space<vmem>>, vector<1x1x16x4xf32>
    %34 = vector.shape_cast %33 : vector<1x1x16x4xf32> to vector<16x4xf32>
    %35 = arith.maximumf %32, %34 : vector<16x4xf32>
    %c0_30 = arith.constant 0 : index
    %c6_31 = arith.constant 6 : index
    %c0_32 = arith.constant 0 : index
    %c0_33 = arith.constant 0 : index
    %36 = vector.load %arg2[%c0_30, %c6_31, %c0_32, %c0_33] : memref<1x16x16x4xf32, #tpu.memory_space<vmem>>, vector<1x1x16x4xf32>
    %37 = vector.shape_cast %36 : vector<1x1x16x4xf32> to vector<16x4xf32>
    %38 = arith.maximumf %35, %37 : vector<16x4xf32>
    %c0_34 = arith.constant 0 : index
    %c7_35 = arith.constant 7 : index
    %c0_36 = arith.constant 0 : index
    %c0_37 = arith.constant 0 : index
    %39 = vector.load %arg2[%c0_34, %c7_35, %c0_36, %c0_37] : memref<1x16x16x4xf32, #tpu.memory_space<vmem>>, vector<1x1x16x4xf32>
    %40 = vector.shape_cast %39 : vector<1x1x16x4xf32> to vector<16x4xf32>
    %41 = arith.maximumf %38, %40 : vector<16x4xf32>
    %42 = vector.extract_strided_slice %41 {offsets = [0, 0], sizes = [4, 4], strides = [1, 1]} : vector<16x4xf32> to vector<4x4xf32>
    %cst_38 = arith.constant dense<0xFF800000> : vector<4xf32>
    %43 = vector.multi_reduction <maximumf>, %42, %cst_38 [0] : vector<4x4xf32> to vector<4xf32>
    %c0_39 = arith.constant 0 : index
    %c9 = arith.constant 9 : index
    %c0_40 = arith.constant 0 : index
    %44 = vector.load %arg3[%c0_39, %c9, %c0_40] : memref<1x21x4xf32, #tpu.memory_space<vmem>>, vector<1x1x4xf32>
    %45 = vector.shape_cast %44 : vector<1x1x4xf32> to vector<4xf32>
    %46 = vector.shape_cast %43 : vector<4xf32> to vector<1x1x4xf32>
    tpu.vector_store %arg3[%c0_39, %c9, %c0_40], %46 {strides = array<i32>} : memref<1x21x4xf32, #tpu.memory_space<vmem>>, vector<1x1x4xf32>,
    %47 = vector.extract_strided_slice %41 {offsets = [4, 0], sizes = [4, 4], strides = [1, 1]} : vector<16x4xf32> to vector<4x4xf32>
    %cst_41 = arith.constant dense<0xFF800000> : vector<4xf32>
    %48 = vector.multi_reduction <maximumf>, %47, %cst_41 [0] : vector<4x4xf32> to vector<4xf32>
    %c0_42 = arith.constant 0 : index
    %c10 = arith.constant 10 : index
    %c0_43 = arith.constant 0 : index
    %49 = vector.load %arg3[%c0_42, %c10, %c0_43] : memref<1x21x4xf32, #tpu.memory_space<vmem>>, vector<1x1x4xf32>
    %50 = vector.shape_cast %49 : vector<1x1x4xf32> to vector<4xf32>
    %51 = vector.shape_cast %48 : vector<4xf32> to vector<1x1x4xf32>
    tpu.vector_store %arg3[%c0_42, %c10, %c0_43], %51 {strides = array<i32>} : memref<1x21x4xf32, #tpu.memory_space<vmem>>, vector<1x1x4xf32>,
    %52 = vector.extract_strided_slice %41 {offsets = [8, 0], sizes = [4, 4], strides = [1, 1]} : vector<16x4xf32> to vector<4x4xf32>
    %cst_44 = arith.constant dense<0xFF800000> : vector<4xf32>
    %53 = vector.multi_reduction <maximumf>, %52, %cst_44 [0] : vector<4x4xf32> to vector<4xf32>
    %c0_45 = arith.constant 0 : index
    %c11 = arith.constant 11 : index
    %c0_46 = arith.constant 0 : index
    %54 = vector.load %arg3[%c0_45, %c11, %c0_46] : memref<1x21x4xf32, #tpu.memory_space<vmem>>, vector<1x1x4xf32>
    %55 = vector.shape_cast %54 : vector<1x1x4xf32> to vector<4xf32>
    %56 = vector.shape_cast %53 : vector<4xf32> to vector<1x1x4xf32>
    tpu.vector_store %arg3[%c0_45, %c11, %c0_46], %56 {strides = array<i32>} : memref<1x21x4xf32, #tpu.memory_space<vmem>>, vector<1x1x4xf32>,
    %57 = vector.extract_strided_slice %41 {offsets = [12, 0], sizes = [4, 4], strides = [1, 1]} : vector<16x4xf32> to vector<4x4xf32>
    %cst_47 = arith.constant dense<0xFF800000> : vector<4xf32>
    %58 = vector.multi_reduction <maximumf>, %57, %cst_47 [0] : vector<4x4xf32> to vector<4xf32>
    %c0_48 = arith.constant 0 : index
    %c12 = arith.constant 12 : index
    %c0_49 = arith.constant 0 : index
    %59 = vector.load %arg3[%c0_48, %c12, %c0_49] : memref<1x21x4xf32, #tpu.memory_space<vmem>>, vector<1x1x4xf32>
    %60 = vector.shape_cast %59 : vector<1x1x4xf32> to vector<4xf32>
    %61 = vector.shape_cast %58 : vector<4xf32> to vector<1x1x4xf32>
    tpu.vector_store %arg3[%c0_48, %c12, %c0_49], %61 {strides = array<i32>} : memref<1x21x4xf32, #tpu.memory_space<vmem>>, vector<1x1x4xf32>,
    %c0_50 = arith.constant 0 : index
    %c8_51 = arith.constant 8 : index
    %c0_52 = arith.constant 0 : index
    %c0_53 = arith.constant 0 : index
    %62 = vector.load %arg2[%c0_50, %c8_51, %c0_52, %c0_53] : memref<1x16x16x4xf32, #tpu.memory_space<vmem>>, vector<1x1x16x4xf32>
    %63 = vector.shape_cast %62 : vector<1x1x16x4xf32> to vector<16x4xf32>
    %c0_54 = arith.constant 0 : index
    %c9_55 = arith.constant 9 : index
    %c0_56 = arith.constant 0 : index
    %c0_57 = arith.constant 0 : index
    %64 = vector.load %arg2[%c0_54, %c9_55, %c0_56, %c0_57] : memref<1x16x16x4xf32, #tpu.memory_space<vmem>>, vector<1x1x16x4xf32>
    %65 = vector.shape_cast %64 : vector<1x1x16x4xf32> to vector<16x4xf32>
    %66 = arith.maximumf %63, %65 : vector<16x4xf32>
    %c0_58 = arith.constant 0 : index
    %c10_59 = arith.constant 10 : index
    %c0_60 = arith.constant 0 : index
    %c0_61 = arith.constant 0 : index
    %67 = vector.load %arg2[%c0_58, %c10_59, %c0_60, %c0_61] : memref<1x16x16x4xf32, #tpu.memory_space<vmem>>, vector<1x1x16x4xf32>
    %68 = vector.shape_cast %67 : vector<1x1x16x4xf32> to vector<16x4xf32>
    %69 = arith.maximumf %66, %68 : vector<16x4xf32>
    %c0_62 = arith.constant 0 : index
    %c11_63 = arith.constant 11 : index
    %c0_64 = arith.constant 0 : index
    %c0_65 = arith.constant 0 : index
    %70 = vector.load %arg2[%c0_62, %c11_63, %c0_64, %c0_65] : memref<1x16x16x4xf32, #tpu.memory_space<vmem>>, vector<1x1x16x4xf32>
    %71 = vector.shape_cast %70 : vector<1x1x16x4xf32> to vector<16x4xf32>
    %72 = arith.maximumf %69, %71 : vector<16x4xf32>
    %73 = vector.extract_strided_slice %72 {offsets = [0, 0], sizes = [4, 4], strides = [1, 1]} : vector<16x4xf32> to vector<4x4xf32>
    %cst_66 = arith.constant dense<0xFF800000> : vector<4xf32>
    %74 = vector.multi_reduction <maximumf>, %73, %cst_66 [0] : vector<4x4xf32> to vector<4xf32>
    %c0_67 = arith.constant 0 : index
    %c13 = arith.constant 13 : index
    %c0_68 = arith.constant 0 : index
    %75 = vector.load %arg3[%c0_67, %c13, %c0_68] : memref<1x21x4xf32, #tpu.memory_space<vmem>>, vector<1x1x4xf32>
    %76 = vector.shape_cast %75 : vector<1x1x4xf32> to vector<4xf32>
    %77 = vector.shape_cast %74 : vector<4xf32> to vector<1x1x4xf32>
    tpu.vector_store %arg3[%c0_67, %c13, %c0_68], %77 {strides = array<i32>} : memref<1x21x4xf32, #tpu.memory_space<vmem>>, vector<1x1x4xf32>,
    %78 = vector.extract_strided_slice %72 {offsets = [4, 0], sizes = [4, 4], strides = [1, 1]} : vector<16x4xf32> to vector<4x4xf32>
    %cst_69 = arith.constant dense<0xFF800000> : vector<4xf32>
    %79 = vector.multi_reduction <maximumf>, %78, %cst_69 [0] : vector<4x4xf32> to vector<4xf32>
    %c0_70 = arith.constant 0 : index
    %c14 = arith.constant 14 : index
    %c0_71 = arith.constant 0 : index
    %80 = vector.load %arg3[%c0_70, %c14, %c0_71] : memref<1x21x4xf32, #tpu.memory_space<vmem>>, vector<1x1x4xf32>
    %81 = vector.shape_cast %80 : vector<1x1x4xf32> to vector<4xf32>
    %82 = vector.shape_cast %79 : vector<4xf32> to vector<1x1x4xf32>
    tpu.vector_store %arg3[%c0_70, %c14, %c0_71], %82 {strides = array<i32>} : memref<1x21x4xf32, #tpu.memory_space<vmem>>, vector<1x1x4xf32>,
    %83 = vector.extract_strided_slice %72 {offsets = [8, 0], sizes = [4, 4], strides = [1, 1]} : vector<16x4xf32> to vector<4x4xf32>
    %cst_72 = arith.constant dense<0xFF800000> : vector<4xf32>
    %84 = vector.multi_reduction <maximumf>, %83, %cst_72 [0] : vector<4x4xf32> to vector<4xf32>
    %c0_73 = arith.constant 0 : index
    %c15 = arith.constant 15 : index
    %c0_74 = arith.constant 0 : index
    %85 = vector.load %arg3[%c0_73, %c15, %c0_74] : memref<1x21x4xf32, #tpu.memory_space<vmem>>, vector<1x1x4xf32>
    %86 = vector.shape_cast %85 : vector<1x1x4xf32> to vector<4xf32>
    %87 = vector.shape_cast %84 : vector<4xf32> to vector<1x1x4xf32>
    tpu.vector_store %arg3[%c0_73, %c15, %c0_74], %87 {strides = array<i32>} : memref<1x21x4xf32, #tpu.memory_space<vmem>>, vector<1x1x4xf32>,
    %88 = vector.extract_strided_slice %72 {offsets = [12, 0], sizes = [4, 4], strides = [1, 1]} : vector<16x4xf32> to vector<4x4xf32>
    %cst_75 = arith.constant dense<0xFF800000> : vector<4xf32>
    %89 = vector.multi_reduction <maximumf>, %88, %cst_75 [0] : vector<4x4xf32> to vector<4xf32>
    %c0_76 = arith.constant 0 : index
    %c16 = arith.constant 16 : index
    %c0_77 = arith.constant 0 : index
    %90 = vector.load %arg3[%c0_76, %c16, %c0_77] : memref<1x21x4xf32, #tpu.memory_space<vmem>>, vector<1x1x4xf32>
    %91 = vector.shape_cast %90 : vector<1x1x4xf32> to vector<4xf32>
    %92 = vector.shape_cast %89 : vector<4xf32> to vector<1x1x4xf32>
    tpu.vector_store %arg3[%c0_76, %c16, %c0_77], %92 {strides = array<i32>} : memref<1x21x4xf32, #tpu.memory_space<vmem>>, vector<1x1x4xf32>,
    %c0_78 = arith.constant 0 : index
    %c12_79 = arith.constant 12 : index
    %c0_80 = arith.constant 0 : index
    %c0_81 = arith.constant 0 : index
    %93 = vector.load %arg2[%c0_78, %c12_79, %c0_80, %c0_81] : memref<1x16x16x4xf32, #tpu.memory_space<vmem>>, vector<1x1x16x4xf32>
    %94 = vector.shape_cast %93 : vector<1x1x16x4xf32> to vector<16x4xf32>
    %c0_82 = arith.constant 0 : index
    %c13_83 = arith.constant 13 : index
    %c0_84 = arith.constant 0 : index
    %c0_85 = arith.constant 0 : index
    %95 = vector.load %arg2[%c0_82, %c13_83, %c0_84, %c0_85] : memref<1x16x16x4xf32, #tpu.memory_space<vmem>>, vector<1x1x16x4xf32>
    %96 = vector.shape_cast %95 : vector<1x1x16x4xf32> to vector<16x4xf32>
    %97 = arith.maximumf %94, %96 : vector<16x4xf32>
    %c0_86 = arith.constant 0 : index
    %c14_87 = arith.constant 14 : index
    %c0_88 = arith.constant 0 : index
    %c0_89 = arith.constant 0 : index
    %98 = vector.load %arg2[%c0_86, %c14_87, %c0_88, %c0_89] : memref<1x16x16x4xf32, #tpu.memory_space<vmem>>, vector<1x1x16x4xf32>
    %99 = vector.shape_cast %98 : vector<1x1x16x4xf32> to vector<16x4xf32>
    %100 = arith.maximumf %97, %99 : vector<16x4xf32>
    %c0_90 = arith.constant 0 : index
    %c15_91 = arith.constant 15 : index
    %c0_92 = arith.constant 0 : index
    %c0_93 = arith.constant 0 : index
    %101 = vector.load %arg2[%c0_90, %c15_91, %c0_92, %c0_93] : memref<1x16x16x4xf32, #tpu.memory_space<vmem>>, vector<1x1x16x4xf32>
    %102 = vector.shape_cast %101 : vector<1x1x16x4xf32> to vector<16x4xf32>
    %103 = arith.maximumf %100, %102 : vector<16x4xf32>
    %104 = vector.extract_strided_slice %103 {offsets = [0, 0], sizes = [4, 4], strides = [1, 1]} : vector<16x4xf32> to vector<4x4xf32>
    %cst_94 = arith.constant dense<0xFF800000> : vector<4xf32>
    %105 = vector.multi_reduction <maximumf>, %104, %cst_94 [0] : vector<4x4xf32> to vector<4xf32>
    %c0_95 = arith.constant 0 : index
    %c17 = arith.constant 17 : index
    %c0_96 = arith.constant 0 : index
    %106 = vector.load %arg3[%c0_95, %c17, %c0_96] : memref<1x21x4xf32, #tpu.memory_space<vmem>>, vector<1x1x4xf32>
    %107 = vector.shape_cast %106 : vector<1x1x4xf32> to vector<4xf32>
    %108 = vector.shape_cast %105 : vector<4xf32> to vector<1x1x4xf32>
    tpu.vector_store %arg3[%c0_95, %c17, %c0_96], %108 {strides = array<i32>} : memref<1x21x4xf32, #tpu.memory_space<vmem>>, vector<1x1x4xf32>,
    %109 = vector.extract_strided_slice %103 {offsets = [4, 0], sizes = [4, 4], strides = [1, 1]} : vector<16x4xf32> to vector<4x4xf32>
    %cst_97 = arith.constant dense<0xFF800000> : vector<4xf32>
    %110 = vector.multi_reduction <maximumf>, %109, %cst_97 [0] : vector<4x4xf32> to vector<4xf32>
    %c0_98 = arith.constant 0 : index
    %c18 = arith.constant 18 : index
    %c0_99 = arith.constant 0 : index
    %111 = vector.load %arg3[%c0_98, %c18, %c0_99] : memref<1x21x4xf32, #tpu.memory_space<vmem>>, vector<1x1x4xf32>
    %112 = vector.shape_cast %111 : vector<1x1x4xf32> to vector<4xf32>
    %113 = vector.shape_cast %110 : vector<4xf32> to vector<1x1x4xf32>
    tpu.vector_store %arg3[%c0_98, %c18, %c0_99], %113 {strides = array<i32>} : memref<1x21x4xf32, #tpu.memory_space<vmem>>, vector<1x1x4xf32>,
    %114 = vector.extract_strided_slice %103 {offsets = [8, 0], sizes = [4, 4], strides = [1, 1]} : vector<16x4xf32> to vector<4x4xf32>
    %cst_100 = arith.constant dense<0xFF800000> : vector<4xf32>
    %115 = vector.multi_reduction <maximumf>, %114, %cst_100 [0] : vector<4x4xf32> to vector<4xf32>
    %c0_101 = arith.constant 0 : index
    %c19 = arith.constant 19 : index
    %c0_102 = arith.constant 0 : index
    %116 = vector.load %arg3[%c0_101, %c19, %c0_102] : memref<1x21x4xf32, #tpu.memory_space<vmem>>, vector<1x1x4xf32>
    %117 = vector.shape_cast %116 : vector<1x1x4xf32> to vector<4xf32>
    %118 = vector.shape_cast %115 : vector<4xf32> to vector<1x1x4xf32>
    tpu.vector_store %arg3[%c0_101, %c19, %c0_102], %118 {strides = array<i32>} : memref<1x21x4xf32, #tpu.memory_space<vmem>>, vector<1x1x4xf32>,
    %119 = vector.extract_strided_slice %103 {offsets = [12, 0], sizes = [4, 4], strides = [1, 1]} : vector<16x4xf32> to vector<4x4xf32>
    %cst_103 = arith.constant dense<0xFF800000> : vector<4xf32>
    %120 = vector.multi_reduction <maximumf>, %119, %cst_103 [0] : vector<4x4xf32> to vector<4xf32>
    %c0_104 = arith.constant 0 : index
    %c20 = arith.constant 20 : index
    %c0_105 = arith.constant 0 : index
    %121 = vector.load %arg3[%c0_104, %c20, %c0_105] : memref<1x21x4xf32, #tpu.memory_space<vmem>>, vector<1x1x4xf32>
    %122 = vector.shape_cast %121 : vector<1x1x4xf32> to vector<4xf32>
    %123 = vector.shape_cast %120 : vector<4xf32> to vector<1x1x4xf32>
    tpu.vector_store %arg3[%c0_104, %c20, %c0_105], %123 {strides = array<i32>} : memref<1x21x4xf32, #tpu.memory_space<vmem>>, vector<1x1x4xf32>,
    %c0_106 = arith.constant 0 : index
    %c5_107 = arith.constant 5 : index
    %c0_108 = arith.constant 0 : index
    %124 = vector.load %arg3[%c0_106, %c5_107, %c0_108] : memref<1x21x4xf32, #tpu.memory_space<vmem>>, vector<1x1x4xf32>
    %125 = vector.shape_cast %124 : vector<1x1x4xf32> to vector<4xf32>
    %c0_109 = arith.constant 0 : index
    %c6_110 = arith.constant 6 : index
    %c0_111 = arith.constant 0 : index
    %126 = vector.load %arg3[%c0_109, %c6_110, %c0_111] : memref<1x21x4xf32, #tpu.memory_space<vmem>>, vector<1x1x4xf32>
    %127 = vector.shape_cast %126 : vector<1x1x4xf32> to vector<4xf32>
    %128 = arith.maximumf %125, %127 : vector<4xf32>
    %c0_112 = arith.constant 0 : index
    %c7_113 = arith.constant 7 : index
    %c0_114 = arith.constant 0 : index
    %129 = vector.load %arg3[%c0_112, %c7_113, %c0_114] : memref<1x21x4xf32, #tpu.memory_space<vmem>>, vector<1x1x4xf32>
    %130 = vector.shape_cast %129 : vector<1x1x4xf32> to vector<4xf32>
    %131 = arith.maximumf %128, %130 : vector<4xf32>
    %c0_115 = arith.constant 0 : index
    %c8_116 = arith.constant 8 : index
    %c0_117 = arith.constant 0 : index
    %132 = vector.load %arg3[%c0_115, %c8_116, %c0_117] : memref<1x21x4xf32, #tpu.memory_space<vmem>>, vector<1x1x4xf32>
    %133 = vector.shape_cast %132 : vector<1x1x4xf32> to vector<4xf32>
    %134 = arith.maximumf %131, %133 : vector<4xf32>
    %c0_118 = arith.constant 0 : index
    %c9_119 = arith.constant 9 : index
    %c0_120 = arith.constant 0 : index
    %135 = vector.load %arg3[%c0_118, %c9_119, %c0_120] : memref<1x21x4xf32, #tpu.memory_space<vmem>>, vector<1x1x4xf32>
    %136 = vector.shape_cast %135 : vector<1x1x4xf32> to vector<4xf32>
    %137 = arith.maximumf %134, %136 : vector<4xf32>
    %c0_121 = arith.constant 0 : index
    %c10_122 = arith.constant 10 : index
    %c0_123 = arith.constant 0 : index
    %138 = vector.load %arg3[%c0_121, %c10_122, %c0_123] : memref<1x21x4xf32, #tpu.memory_space<vmem>>, vector<1x1x4xf32>
    %139 = vector.shape_cast %138 : vector<1x1x4xf32> to vector<4xf32>
    %140 = arith.maximumf %137, %139 : vector<4xf32>
    %c0_124 = arith.constant 0 : index
    %c11_125 = arith.constant 11 : index
    %c0_126 = arith.constant 0 : index
    %141 = vector.load %arg3[%c0_124, %c11_125, %c0_126] : memref<1x21x4xf32, #tpu.memory_space<vmem>>, vector<1x1x4xf32>
    %142 = vector.shape_cast %141 : vector<1x1x4xf32> to vector<4xf32>
    %143 = arith.maximumf %140, %142 : vector<4xf32>
    %c0_127 = arith.constant 0 : index
    %c12_128 = arith.constant 12 : index
    %c0_129 = arith.constant 0 : index
    %144 = vector.load %arg3[%c0_127, %c12_128, %c0_129] : memref<1x21x4xf32, #tpu.memory_space<vmem>>, vector<1x1x4xf32>
    %145 = vector.shape_cast %144 : vector<1x1x4xf32> to vector<4xf32>
    %146 = arith.maximumf %143, %145 : vector<4xf32>
    %c0_130 = arith.constant 0 : index
    %c13_131 = arith.constant 13 : index
    %c0_132 = arith.constant 0 : index
    %147 = vector.load %arg3[%c0_130, %c13_131, %c0_132] : memref<1x21x4xf32, #tpu.memory_space<vmem>>, vector<1x1x4xf32>
    %148 = vector.shape_cast %147 : vector<1x1x4xf32> to vector<4xf32>
    %149 = arith.maximumf %146, %148 : vector<4xf32>
    %c0_133 = arith.constant 0 : index
    %c14_134 = arith.constant 14 : index
    %c0_135 = arith.constant 0 : index
    %150 = vector.load %arg3[%c0_133, %c14_134, %c0_135] : memref<1x21x4xf32, #tpu.memory_space<vmem>>, vector<1x1x4xf32>
    %151 = vector.shape_cast %150 : vector<1x1x4xf32> to vector<4xf32>
    %152 = arith.maximumf %149, %151 : vector<4xf32>
    %c0_136 = arith.constant 0 : index
    %c15_137 = arith.constant 15 : index
    %c0_138 = arith.constant 0 : index
    %153 = vector.load %arg3[%c0_136, %c15_137, %c0_138] : memref<1x21x4xf32, #tpu.memory_space<vmem>>, vector<1x1x4xf32>
    %154 = vector.shape_cast %153 : vector<1x1x4xf32> to vector<4xf32>
    %155 = arith.maximumf %152, %154 : vector<4xf32>
    %c0_139 = arith.constant 0 : index
    %c16_140 = arith.constant 16 : index
    %c0_141 = arith.constant 0 : index
    %156 = vector.load %arg3[%c0_139, %c16_140, %c0_141] : memref<1x21x4xf32, #tpu.memory_space<vmem>>, vector<1x1x4xf32>
    %157 = vector.shape_cast %156 : vector<1x1x4xf32> to vector<4xf32>
    %158 = arith.maximumf %155, %157 : vector<4xf32>
    %c0_142 = arith.constant 0 : index
    %c17_143 = arith.constant 17 : index
    %c0_144 = arith.constant 0 : index
    %159 = vector.load %arg3[%c0_142, %c17_143, %c0_144] : memref<1x21x4xf32, #tpu.memory_space<vmem>>, vector<1x1x4xf32>
    %160 = vector.shape_cast %159 : vector<1x1x4xf32> to vector<4xf32>
    %161 = arith.maximumf %158, %160 : vector<4xf32>
    %c0_145 = arith.constant 0 : index
    %c18_146 = arith.constant 18 : index
    %c0_147 = arith.constant 0 : index
    %162 = vector.load %arg3[%c0_145, %c18_146, %c0_147] : memref<1x21x4xf32, #tpu.memory_space<vmem>>, vector<1x1x4xf32>
    %163 = vector.shape_cast %162 : vector<1x1x4xf32> to vector<4xf32>
    %164 = arith.maximumf %161, %163 : vector<4xf32>
    %c0_148 = arith.constant 0 : index
    %c19_149 = arith.constant 19 : index
    %c0_150 = arith.constant 0 : index
    %165 = vector.load %arg3[%c0_148, %c19_149, %c0_150] : memref<1x21x4xf32, #tpu.memory_space<vmem>>, vector<1x1x4xf32>
    %166 = vector.shape_cast %165 : vector<1x1x4xf32> to vector<4xf32>
    %167 = arith.maximumf %164, %166 : vector<4xf32>
    %c0_151 = arith.constant 0 : index
    %c20_152 = arith.constant 20 : index
    %c0_153 = arith.constant 0 : index
    %168 = vector.load %arg3[%c0_151, %c20_152, %c0_153] : memref<1x21x4xf32, #tpu.memory_space<vmem>>, vector<1x1x4xf32>
    %169 = vector.shape_cast %168 : vector<1x1x4xf32> to vector<4xf32>
    %170 = arith.maximumf %167, %169 : vector<4xf32>
    %c0_154 = arith.constant 0 : index
    %c0_155 = arith.constant 0 : index
    %c0_156 = arith.constant 0 : index
    %171 = vector.load %arg3[%c0_154, %c0_155, %c0_156] : memref<1x21x4xf32, #tpu.memory_space<vmem>>, vector<1x1x4xf32>
    %172 = vector.shape_cast %171 : vector<1x1x4xf32> to vector<4xf32>
    %173 = vector.shape_cast %170 : vector<4xf32> to vector<1x1x4xf32>
    tpu.vector_store %arg3[%c0_154, %c0_155, %c0_156], %173 {strides = array<i32>} : memref<1x21x4xf32, #tpu.memory_space<vmem>>, vector<1x1x4xf32>,
    %c0_157 = arith.constant 0 : index
    %c5_158 = arith.constant 5 : index
    %c0_159 = arith.constant 0 : index
    %174 = vector.load %arg3[%c0_157, %c5_158, %c0_159] : memref<1x21x4xf32, #tpu.memory_space<vmem>>, vector<1x1x4xf32>
    %175 = vector.shape_cast %174 : vector<1x1x4xf32> to vector<4xf32>
    %c0_160 = arith.constant 0 : index
    %c6_161 = arith.constant 6 : index
    %c0_162 = arith.constant 0 : index
    %176 = vector.load %arg3[%c0_160, %c6_161, %c0_162] : memref<1x21x4xf32, #tpu.memory_space<vmem>>, vector<1x1x4xf32>
    %177 = vector.shape_cast %176 : vector<1x1x4xf32> to vector<4xf32>
    %178 = arith.maximumf %175, %177 : vector<4xf32>
    %c0_163 = arith.constant 0 : index
    %c9_164 = arith.constant 9 : index
    %c0_165 = arith.constant 0 : index
    %179 = vector.load %arg3[%c0_163, %c9_164, %c0_165] : memref<1x21x4xf32, #tpu.memory_space<vmem>>, vector<1x1x4xf32>
    %180 = vector.shape_cast %179 : vector<1x1x4xf32> to vector<4xf32>
    %181 = arith.maximumf %178, %180 : vector<4xf32>
    %c0_166 = arith.constant 0 : index
    %c10_167 = arith.constant 10 : index
    %c0_168 = arith.constant 0 : index
    %182 = vector.load %arg3[%c0_166, %c10_167, %c0_168] : memref<1x21x4xf32, #tpu.memory_space<vmem>>, vector<1x1x4xf32>
    %183 = vector.shape_cast %182 : vector<1x1x4xf32> to vector<4xf32>
    %184 = arith.maximumf %181, %183 : vector<4xf32>
    %c0_169 = arith.constant 0 : index
    %c1_170 = arith.constant 1 : index
    %c0_171 = arith.constant 0 : index
    %185 = vector.load %arg3[%c0_169, %c1_170, %c0_171] : memref<1x21x4xf32, #tpu.memory_space<vmem>>, vector<1x1x4xf32>
    %186 = vector.shape_cast %185 : vector<1x1x4xf32> to vector<4xf32>
    %187 = vector.shape_cast %184 : vector<4xf32> to vector<1x1x4xf32>
    tpu.vector_store %arg3[%c0_169, %c1_170, %c0_171], %187 {strides = array<i32>} : memref<1x21x4xf32, #tpu.memory_space<vmem>>, vector<1x1x4xf32>,
    %c0_172 = arith.constant 0 : index
    %c7_173 = arith.constant 7 : index
    %c0_174 = arith.constant 0 : index
    %188 = vector.load %arg3[%c0_172, %c7_173, %c0_174] : memref<1x21x4xf32, #tpu.memory_space<vmem>>, vector<1x1x4xf32>
    %189 = vector.shape_cast %188 : vector<1x1x4xf32> to vector<4xf32>
    %c0_175 = arith.constant 0 : index
    %c8_176 = arith.constant 8 : index
    %c0_177 = arith.constant 0 : index
    %190 = vector.load %arg3[%c0_175, %c8_176, %c0_177] : memref<1x21x4xf32, #tpu.memory_space<vmem>>, vector<1x1x4xf32>
    %191 = vector.shape_cast %190 : vector<1x1x4xf32> to vector<4xf32>
    %192 = arith.maximumf %189, %191 : vector<4xf32>
    %c0_178 = arith.constant 0 : index
    %c11_179 = arith.constant 11 : index
    %c0_180 = arith.constant 0 : index
    %193 = vector.load %arg3[%c0_178, %c11_179, %c0_180] : memref<1x21x4xf32, #tpu.memory_space<vmem>>, vector<1x1x4xf32>
    %194 = vector.shape_cast %193 : vector<1x1x4xf32> to vector<4xf32>
    %195 = arith.maximumf %192, %194 : vector<4xf32>
    %c0_181 = arith.constant 0 : index
    %c12_182 = arith.constant 12 : index
    %c0_183 = arith.constant 0 : index
    %196 = vector.load %arg3[%c0_181, %c12_182, %c0_183] : memref<1x21x4xf32, #tpu.memory_space<vmem>>, vector<1x1x4xf32>
    %197 = vector.shape_cast %196 : vector<1x1x4xf32> to vector<4xf32>
    %198 = arith.maximumf %195, %197 : vector<4xf32>
    %c0_184 = arith.constant 0 : index
    %c2_185 = arith.constant 2 : index
    %c0_186 = arith.constant 0 : index
    %199 = vector.load %arg3[%c0_184, %c2_185, %c0_186] : memref<1x21x4xf32, #tpu.memory_space<vmem>>, vector<1x1x4xf32>
    %200 = vector.shape_cast %199 : vector<1x1x4xf32> to vector<4xf32>
    %201 = vector.shape_cast %198 : vector<4xf32> to vector<1x1x4xf32>
    tpu.vector_store %arg3[%c0_184, %c2_185, %c0_186], %201 {strides = array<i32>} : memref<1x21x4xf32, #tpu.memory_space<vmem>>, vector<1x1x4xf32>,
    %c0_187 = arith.constant 0 : index
    %c13_188 = arith.constant 13 : index
    %c0_189 = arith.constant 0 : index
    %202 = vector.load %arg3[%c0_187, %c13_188, %c0_189] : memref<1x21x4xf32, #tpu.memory_space<vmem>>, vector<1x1x4xf32>
    %203 = vector.shape_cast %202 : vector<1x1x4xf32> to vector<4xf32>
    %c0_190 = arith.constant 0 : index
    %c14_191 = arith.constant 14 : index
    %c0_192 = arith.constant 0 : index
    %204 = vector.load %arg3[%c0_190, %c14_191, %c0_192] : memref<1x21x4xf32, #tpu.memory_space<vmem>>, vector<1x1x4xf32>
    %205 = vector.shape_cast %204 : vector<1x1x4xf32> to vector<4xf32>
    %206 = arith.maximumf %203, %205 : vector<4xf32>
    %c0_193 = arith.constant 0 : index
    %c17_194 = arith.constant 17 : index
    %c0_195 = arith.constant 0 : index
    %207 = vector.load %arg3[%c0_193, %c17_194, %c0_195] : memref<1x21x4xf32, #tpu.memory_space<vmem>>, vector<1x1x4xf32>
    %208 = vector.shape_cast %207 : vector<1x1x4xf32> to vector<4xf32>
    %209 = arith.maximumf %206, %208 : vector<4xf32>
    %c0_196 = arith.constant 0 : index
    %c18_197 = arith.constant 18 : index
    %c0_198 = arith.constant 0 : index
    %210 = vector.load %arg3[%c0_196, %c18_197, %c0_198] : memref<1x21x4xf32, #tpu.memory_space<vmem>>, vector<1x1x4xf32>
    %211 = vector.shape_cast %210 : vector<1x1x4xf32> to vector<4xf32>
    %212 = arith.maximumf %209, %211 : vector<4xf32>
    %c0_199 = arith.constant 0 : index
    %c3_200 = arith.constant 3 : index
    %c0_201 = arith.constant 0 : index
    %213 = vector.load %arg3[%c0_199, %c3_200, %c0_201] : memref<1x21x4xf32, #tpu.memory_space<vmem>>, vector<1x1x4xf32>
    %214 = vector.shape_cast %213 : vector<1x1x4xf32> to vector<4xf32>
    %215 = vector.shape_cast %212 : vector<4xf32> to vector<1x1x4xf32>
    tpu.vector_store %arg3[%c0_199, %c3_200, %c0_201], %215 {strides = array<i32>} : memref<1x21x4xf32, #tpu.memory_space<vmem>>, vector<1x1x4xf32>,
    %c0_202 = arith.constant 0 : index
    %c15_203 = arith.constant 15 : index
    %c0_204 = arith.constant 0 : index
    %216 = vector.load %arg3[%c0_202, %c15_203, %c0_204] : memref<1x21x4xf32, #tpu.memory_space<vmem>>, vector<1x1x4xf32>
    %217 = vector.shape_cast %216 : vector<1x1x4xf32> to vector<4xf32>
    %c0_205 = arith.constant 0 : index
    %c16_206 = arith.constant 16 : index
    %c0_207 = arith.constant 0 : index
    %218 = vector.load %arg3[%c0_205, %c16_206, %c0_207] : memref<1x21x4xf32, #tpu.memory_space<vmem>>, vector<1x1x4xf32>
    %219 = vector.shape_cast %218 : vector<1x1x4xf32> to vector<4xf32>
    %220 = arith.maximumf %217, %219 : vector<4xf32>
    %c0_208 = arith.constant 0 : index
    %c19_209 = arith.constant 19 : index
    %c0_210 = arith.constant 0 : index
    %221 = vector.load %arg3[%c0_208, %c19_209, %c0_210] : memref<1x21x4xf32, #tpu.memory_space<vmem>>, vector<1x1x4xf32>
    %222 = vector.shape_cast %221 : vector<1x1x4xf32> to vector<4xf32>
    %223 = arith.maximumf %220, %222 : vector<4xf32>
    %c0_211 = arith.constant 0 : index
    %c20_212 = arith.constant 20 : index
    %c0_213 = arith.constant 0 : index
    %224 = vector.load %arg3[%c0_211, %c20_212, %c0_213] : memref<1x21x4xf32, #tpu.memory_space<vmem>>, vector<1x1x4xf32>
    %225 = vector.shape_cast %224 : vector<1x1x4xf32> to vector<4xf32>
    %226 = arith.maximumf %223, %225 : vector<4xf32>
    %c0_214 = arith.constant 0 : index
    %c4_215 = arith.constant 4 : index
    %c0_216 = arith.constant 0 : index
    %227 = vector.load %arg3[%c0_214, %c4_215, %c0_216] : memref<1x21x4xf32, #tpu.memory_space<vmem>>, vector<1x1x4xf32>
    %228 = vector.shape_cast %227 : vector<1x1x4xf32> to vector<4xf32>
    %229 = vector.shape_cast %226 : vector<4xf32> to vector<1x1x4xf32>
    tpu.vector_store %arg3[%c0_214, %c4_215, %c0_216], %229 {strides = array<i32>} : memref<1x21x4xf32, #tpu.memory_space<vmem>>, vector<1x1x4xf32>,
    return
  }
  func.func @transform_0(%arg0: i32, %arg1: i32) -> (i32, i32, i32, i32) {
    %c0_i32 = arith.constant 0 : i32
    %c0_i32_0 = arith.constant 0 : i32
    %c0_i32_1 = arith.constant 0 : i32
    return %arg0, %c0_i32, %c0_i32_0, %arg1 : i32, i32, i32, i32
  }
  func.func @transform_1(%arg0: i32, %arg1: i32) -> (i32, i32, i32) {
    %c0_i32 = arith.constant 0 : i32
    %c0_i32_0 = arith.constant 0 : i32
    return %arg0, %c0_i32, %arg1 : i32, i32, i32
  }
}

</mosaic_0001>

<llo_original>
// kernel: tpu_custom_call.1
$region0: #{tpu_custom_call.1}
  #allocation0 [shape = 'u32[]', space=smem, size = 0x4, offset = 0x4, fixed_abs, tag = 'smem constant byte address 0x4 - core index']
  #allocation1 [shape = 'u32[144,128]{1,0:T(1,128)}', space=vmem, size = 0x12000, scoped, tag = 'internal scratch']
  %s0 = inlined_call_operand.vmem [shape: f32[2,16,16,4], index: 0, kind: input, shape index: {}]
  %s1 = inlined_call_operand.vmem [shape: f32[2,21,4], index: 1, kind: output, shape index: {}]
  %s2 = sld [smem:[#allocation0]]
  $region37: #{tpu_custom_call.1} parent=0
    _
  %s4 = ssub.s32 1, %s2
  %s5 = scalar_select 0, %s4, %s2
  loop: start=0, step=1, limit=4
  $region2: #{tpu_custom_call.1} parent=0 // loop_pre_header
    _
  $region3: #{tpu_custom_call.1} parent=0 // loop_header
    %s7 = sphi 0, %s11
    %p8 = scmp.ge.s32.totalorder %s7, 4
    %s14 = sphi 0, %s26
    %s15 = sphi 0, %s22
    %s16 = sphi 0, %s14
    %s17 = sphi 0, %s15
    %s18 = sphi 0, %s16
    %s19 = sphi 0, %s17
    %s31 = sphi 0, %s33
    %s34 = sphi 0, %s31
    %s35 = sphi 0, %s34
    %s51 = sphi 0, %s35
    %s59 = sphi 0, %s61
    %s62 = sphi 0, %s59
    %s63 = sphi 0, %s62
    %s79 = sphi 0, %s63
  $region4: #{tpu_custom_call.1} parent=0 // loop_header_branch
    %10 = sbr.rel (%p8) target = $region8
  $region5: #{tpu_custom_call.1} parent=0 // loop_body
    %s12 = ssub.s32 %s7, 1
    %s13 = ssub.s32 %s7, 2
    %s20 = sadd.s32 1, %s15
    %p21 = scmp.ge.s32.totalorder %s20, 1
    %s22 = scalar_select %p21, 0, %s20
    %s23 = sadd.s32 1, %s14
    %s24 = scalar_select %p21, %s23, %s14
    %p25 = scmp.ge.s32.totalorder %s24, 2
    %s26 = scalar_select %p25, 0, %s24
    %s27 = ssub.s32 %s14, %s26
    %s28 = ssub.s32 %s15, %s22
    %s29 = sor.u32 %s27, %s28
    %p30 = scmp.eq.s32.totalorder %s29, 0
    %s32 = sadd.s32 %s31, 1
    %s33 = scalar_select %p30, %s31, %s32
    %p36 = pneg %p30
    %p37 = scmp.eq.s32.totalorder %s7, 1
    %p38 = por %p36, %p37
    %p39 = scmp.ne.s32.totalorder %s31, %s34
    %p40 = scmp.eq.s32.totalorder %s7, 0
    %p41 = por %p39, %p40
    %p42 = scmp.ne.s32.totalorder %s31, %s34
    %p43 = scmp.eq.s32.totalorder %s12, 1
    %p44 = por %p42, %p43
    %p45 = scmp.ne.s32.totalorder %s34, %s35
    %p46 = scmp.eq.s32.totalorder %s12, 0
    %p47 = por %p45, %p46
    %p48 = scmp.ne.s32.totalorder %s34, %s35
    %p49 = scmp.eq.s32.totalorder %s13, 1
    %p50 = por %p48, %p49
    %p52 = scmp.ne.s32.totalorder %s35, %s51
    %p53 = scmp.eq.s32.totalorder %s13, 0
    %p54 = por %p52, %p53
    %s55 = ssub.s32 %s14, %s26
    %s56 = ssub.s32 %s15, %s22
    %s57 = sor.u32 %s55, %s56
    %p58 = scmp.eq.s32.totalorder %s57, 0
    %s60 = sadd.s32 %s59, 1
    %s61 = scalar_select %p58, %s59, %s60
    %p64 = pneg %p58
    %p65 = scmp.eq.s32.totalorder %s7, 1
    %p66 = por %p64, %p65
    %p67 = scmp.ne.s32.totalorder %s59, %s62
    %p68 = scmp.eq.s32.totalorder %s7, 0
    %p69 = por %p67, %p68
    %p70 = scmp.ne.s32.totalorder %s59, %s62
    %p71 = scmp.eq.s32.totalorder %s12, 1
    %p72 = por %p70, %p71
    %p73 = scmp.ne.s32.totalorder %s62, %s63
    %p74 = scmp.eq.s32.totalorder %s12, 0
    %p75 = por %p73, %p74
    %p76 = scmp.ne.s32.totalorder %s62, %s63
    %p77 = scmp.eq.s32.totalorder %s13, 1
    %p78 = por %p76, %p77
    %p80 = scmp.ne.s32.totalorder %s63, %s79
    %p81 = scmp.eq.s32.totalorder %s13, 0
    %p82 = por %p80, %p81
    %p83 = scmp.le.s32.totalorder 1, %s7
    %p84 = scmp.lt.s32.totalorder %s7, 3
    %p85 = pnand %p83, %p84
    %p86 = pneg %p85
    // Predicated region
    $region9: #{tpu_custom_call.1} parent=5 // pred_check
      _
    $region10: #{tpu_custom_call.1} parent=5 // pred_check_branch
      %88 = sbr.rel (%p85) target = $region12
    $region11: #{tpu_custom_call.1} parent=5 // pred_region
      %s89 = ssub.s32 %s7, 1
    $region12: #{tpu_custom_call.1} parent=5 // pred_fallthru
      _
    %p90 = scmp.lt.s32.totalorder %s7, 2
    // Predicated region
    $region13: #{tpu_custom_call.1} parent=5 // pred_check
      %p91 = pneg %p90
    $region14: #{tpu_custom_call.1} parent=5 // pred_check_branch
      %93 = sbr.rel (%p91) target = $region16
    $region15: #{tpu_custom_call.1} parent=5 // pred_region
      // Predicated region
      $region17: #{tpu_custom_call.1} parent=15 // pred_check
        %p94 = pneg %p41
      $region18: #{tpu_custom_call.1} parent=15 // pred_check_branch
        %96 = sbr.rel (%p94) target = $region20
      $region19: #{tpu_custom_call.1} parent=15 // pred_region
        %p97 = scmp.lt.s32.totalorder %s14, 1
        %s98 = scalar_select %p97, %s14, 1
        %p99 = scmp.lt.s32.totalorder %s15, 0
        %s100 = scalar_select %p99, %s15, 0
        %s101 = smul.addr %s98, 32
        %s102 = sadd.s32 %s100, %s101
        %s103 = smul.addr %s102, 8
        %s104 = scalar_lea.vmem %s0, %s103
      $region20: #{tpu_custom_call.1} parent=15 // pred_fallthru
        _
    $region16: #{tpu_custom_call.1} parent=5 // pred_fallthru
      _
    %p105 = scmp.le.s32.totalorder 1, %s7
    %p106 = scmp.lt.s32.totalorder %s7, 3
    %p107 = pnand %p105, %p106
    %p108 = pneg %p107
    // Predicated region
    $region21: #{tpu_custom_call.1} parent=5 // pred_check
      _
    $region22: #{tpu_custom_call.1} parent=5 // pred_check_branch
      %110 = sbr.rel (%p107) target = $region24
    $region23: #{tpu_custom_call.1} parent=5 // pred_region
      %s111 = ssub.s32 %s7, 1
      %p112 = scmp.lt.s32.totalorder %s16, 1
      %s113 = scalar_select %p112, %s16, 1
      %p114 = scmp.lt.s32.totalorder %s17, 0
      %s115 = scalar_select %p114, %s17, 0
      %s116 = smul.addr %s113, 32
      %s117 = sadd.s32 %s115, %s116
      %s118 = smul.addr %s117, 8
      %s119 = scalar_lea.vmem %s0, %s118
      %p120 = pneg %p47
      %p121 = pneg %p44
      %p122 = pneg %p75
      %p123 = pneg %p72
      %p124 = scmp.lt.s32.totalorder %s16, 1
      %s125 = scalar_select %p124, %s16, 1
      %p126 = scmp.lt.s32.totalorder %s17, 0
      %s127 = scalar_select %p126, %s17, 0
      %s128 = smul.addr %s125, 3
      %s129 = sadd.s32 %s127, %s128
      %s130 = smul.addr %s129, 8
      %s131 = scalar_lea.vmem %s1, %s130
      %p132 = scmp.lt.s32.totalorder %s16, 1
      %s133 = scalar_select %p132, %s16, 1
      %p134 = scmp.lt.s32.totalorder %s17, 0
      %s135 = scalar_select %p134, %s17, 0
      %s136 = smul.addr %s133, 32
      %s137 = sadd.s32 %s135, %s136
      %s138 = smul.addr %s137, 8
      %s139 = scalar_lea.vmem %s0, %s138
      %p140 = scmp.lt.s32.totalorder %s16, 1
      %s141 = scalar_select %p140, %s16, 1
      %p142 = scmp.lt.s32.totalorder %s17, 0
      %s143 = scalar_select %p142, %s17, 0
      %s144 = smul.addr %s141, 3
      %s145 = sadd.s32 %s143, %s144
      %s146 = smul.addr %s145, 8
      %s147 = scalar_lea.vmem %s1, %s146
      %v148 = vld [vmem:[%s139] sm:$0xff]
      %v149 = vld [vmem:[%s139 + $0x8] sm:$0xff]
      %s150 = scalar_lea.vmem %s139, 16
      %v151 = vld [vmem:[%s150] sm:$0xff]
      %v152 = vld [vmem:[%s150 + $0x8] sm:$0xff]
      %v153 = vmax.f32 %v148, %v151
      %v154 = vmax.f32 %v149, %v152
      %s155 = scalar_lea.vmem %s139, 32
      %v156 = vld [vmem:[%s155] sm:$0xff]
      %v157 = vld [vmem:[%s155 + $0x8] sm:$0xff]
      %v158 = vmax.f32 %v153, %v156
      %v159 = vmax.f32 %v154, %v157
      %s160 = scalar_lea.vmem %s139, 48
      %v161 = vld [vmem:[%s160] sm:$0xff]
      %v162 = vld [vmem:[%s160 + $0x8] sm:$0xff]
      %v163 = vmax.f32 %v158, %v161
      %v164 = vmax.f32 %v159, %v162
      %vm165 = vcmask 27648
      %v166 = vsel %vm165, %v163, -inf
      %v167 = vrot.slane %v166, 4
      %v168 = vmax.f32 %v166, %v167
      %v169 = vrot.slane %v168, 2
      %v170 = vmax.f32 %v168, %v169
      %v171 = vrot.slane %v170, 1
      %v172 = vmax.f32 %v170, %v171
      %vm173 = vcmask 24576
      %174 = vst.msk [vmem:[%s147 + $0x5] sm:$0x1] %vm173, %v172
      %vm175 = vcmask 31748
      %v176 = vsel %vm175, %v163, -inf
      %v177 = vrot.slane %v176, 4
      %v178 = vmax.f32 %v176, %v177
      %v179 = vrot.slane %v178, 2
      %v180 = vmax.f32 %v178, %v179
      %v181 = vrot.slane %v180, 1
      %v182 = vmax.f32 %v180, %v181
      %183 = vst.msk [vmem:[%s147 + $0x6] sm:$0x1] %vm173, %v182
      %v184 = vsel %vm165, %v164, -inf
      %v185 = vrot.slane %v184, 4
      %v186 = vmax.f32 %v184, %v185
      %v187 = vrot.slane %v186, 2
      %v188 = vmax.f32 %v186, %v187
      %v189 = vrot.slane %v188, 1
      %v190 = vmax.f32 %v188, %v189
      %191 = vst.msk [vmem:[%s147 + $0x7] sm:$0x1] %vm173, %v190
      %v192 = vsel %vm175, %v164, -inf
      %v193 = vrot.slane %v192, 4
      %v194 = vmax.f32 %v192, %v193
      %v195 = vrot.slane %v194, 2
      %v196 = vmax.f32 %v194, %v195
      %v197 = vrot.slane %v196, 1
      %v198 = vmax.f32 %v196, %v197
      %199 = vst.msk [vmem:[%s147 + $0x8] sm:$0x1] %vm173, %v198
      %s200 = scalar_lea.vmem %s139, 64
      %v201 = vld [vmem:[%s200] sm:$0xff]
      %v202 = vld [vmem:[%s200 + $0x8] sm:$0xff]
      %s203 = scalar_lea.vmem %s139, 80
      %v204 = vld [vmem:[%s203] sm:$0xff]
      %v205 = vld [vmem:[%s203 + $0x8] sm:$0xff]
      %v206 = vmax.f32 %v201, %v204
      %v207 = vmax.f32 %v202, %v205
      %s208 = scalar_lea.vmem %s139, 96
      %v209 = vld [vmem:[%s208] sm:$0xff]
      %v210 = vld [vmem:[%s208 + $0x8] sm:$0xff]
      %v211 = vmax.f32 %v206, %v209
      %v212 = vmax.f32 %v207, %v210
      %s213 = scalar_lea.vmem %s139, 112
      %v214 = vld [vmem:[%s213] sm:$0xff]
      %v215 = vld [vmem:[%s213 + $0x8] sm:$0xff]
      %v216 = vmax.f32 %v211, %v214
      %v217 = vmax.f32 %v212, %v215
      %v218 = vsel %vm165, %v216, -inf
      %v219 = vrot.slane %v218, 4
      %v220 = vmax.f32 %v218, %v219
      %v221 = vrot.slane %v220, 2
      %v222 = vmax.f32 %v220, %v221
      %v223 = vrot.slane %v222, 1
      %v224 = vmax.f32 %v222, %v223
      %225 = vst.msk [vmem:[%s147 + $0x9] sm:$0x1] %vm173, %v224
      %v226 = vsel %vm175, %v216, -inf
      %v227 = vrot.slane %v226, 4
      %v228 = vmax.f32 %v226, %v227
      %v229 = vrot.slane %v228, 2
      %v230 = vmax.f32 %v228, %v229
      %v231 = vrot.slane %v230, 1
      %v232 = vmax.f32 %v230, %v231
      %233 = vst.msk [vmem:[%s147 + $0xa] sm:$0x1] %vm173, %v232
      %v234 = vsel %vm165, %v217, -inf
      %v235 = vrot.slane %v234, 4
      %v236 = vmax.f32 %v234, %v235
      %v237 = vrot.slane %v236, 2
      %v238 = vmax.f32 %v236, %v237
      %v239 = vrot.slane %v238, 1
      %v240 = vmax.f32 %v238, %v239
      %241 = vst.msk [vmem:[%s147 + $0xb] sm:$0x1] %vm173, %v240
      %v242 = vsel %vm175, %v217, -inf
      %v243 = vrot.slane %v242, 4
      %v244 = vmax.f32 %v242, %v243
      %v245 = vrot.slane %v244, 2
      %v246 = vmax.f32 %v244, %v245
      %v247 = vrot.slane %v246, 1
      %v248 = vmax.f32 %v246, %v247
      %249 = vst.msk [vmem:[%s147 + $0xc] sm:$0x1] %vm173, %v248
      %s250 = scalar_lea.vmem %s139, 128
      %v251 = vld [vmem:[%s250] sm:$0xff]
      %v252 = vld [vmem:[%s250 + $0x8] sm:$0xff]
      %s253 = scalar_lea.vmem %s139, 144
      %v254 = vld [vmem:[%s253] sm:$0xff]
      %v255 = vld [vmem:[%s253 + $0x8] sm:$0xff]
      %v256 = vmax.f32 %v251, %v254
      %v257 = vmax.f32 %v252, %v255
      %s258 = scalar_lea.vmem %s139, 160
      %v259 = vld [vmem:[%s258] sm:$0xff]
      %v260 = vld [vmem:[%s258 + $0x8] sm:$0xff]
      %v261 = vmax.f32 %v256, %v259
      %v262 = vmax.f32 %v257, %v260
      %s263 = scalar_lea.vmem %s139, 176
      %v264 = vld [vmem:[%s263] sm:$0xff]
      %v265 = vld [vmem:[%s263 + $0x8] sm:$0xff]
      %v266 = vmax.f32 %v261, %v264
      %v267 = vmax.f32 %v262, %v265
      %v268 = vsel %vm165, %v266, -inf
      %v269 = vrot.slane %v268, 4
      %v270 = vmax.f32 %v268, %v269
      %v271 = vrot.slane %v270, 2
      %v272 = vmax.f32 %v270, %v271
      %v273 = vrot.slane %v272, 1
      %v274 = vmax.f32 %v272, %v273
      %275 = vst.msk [vmem:[%s147 + $0xd] sm:$0x1] %vm173, %v274
      %v276 = vsel %vm175, %v266, -inf
      %v277 = vrot.slane %v276, 4
      %v278 = vmax.f32 %v276, %v277
      %v279 = vrot.slane %v278, 2
      %v280 = vmax.f32 %v278, %v279
      %v281 = vrot.slane %v280, 1
      %v282 = vmax.f32 %v280, %v281
      %283 = vst.msk [vmem:[%s147 + $0xe] sm:$0x1] %vm173, %v282
      %v284 = vsel %vm165, %v267, -inf
      %v285 = vrot.slane %v284, 4
      %v286 = vmax.f32 %v284, %v285
      %v287 = vrot.slane %v286, 2
      %v288 = vmax.f32 %v286, %v287
      %v289 = vrot.slane %v288, 1
      %v290 = vmax.f32 %v288, %v289
      %291 = vst.msk [vmem:[%s147 + $0xf] sm:$0x1] %vm173, %v290
      %v292 = vsel %vm175, %v267, -inf
      %v293 = vrot.slane %v292, 4
      %v294 = vmax.f32 %v292, %v293
      %v295 = vrot.slane %v294, 2
      %v296 = vmax.f32 %v294, %v295
      %v297 = vrot.slane %v296, 1
      %v298 = vmax.f32 %v296, %v297
      %299 = vst.msk [vmem:[%s147 + $0x10] sm:$0x1] %vm173, %v298
      %s300 = scalar_lea.vmem %s139, 192
      %v301 = vld [vmem:[%s300] sm:$0xff]
      %v302 = vld [vmem:[%s300 + $0x8] sm:$0xff]
      %s303 = scalar_lea.vmem %s139, 208
      %v304 = vld [vmem:[%s303] sm:$0xff]
      %v305 = vld [vmem:[%s303 + $0x8] sm:$0xff]
      %v306 = vmax.f32 %v301, %v304
      %v307 = vmax.f32 %v302, %v305
      %s308 = scalar_lea.vmem %s139, 224
      %v309 = vld [vmem:[%s308] sm:$0xff]
      %v310 = vld [vmem:[%s308 + $0x8] sm:$0xff]
      %v311 = vmax.f32 %v306, %v309
      %v312 = vmax.f32 %v307, %v310
      %s313 = scalar_lea.vmem %s139, 240
      %v314 = vld [vmem:[%s313] sm:$0xff]
      %v315 = vld [vmem:[%s313 + $0x8] sm:$0xff]
      %v316 = vmax.f32 %v311, %v314
      %v317 = vmax.f32 %v312, %v315
      %v318 = vsel %vm165, %v316, -inf
      %v319 = vrot.slane %v318, 4
      %v320 = vmax.f32 %v318, %v319
      %v321 = vrot.slane %v320, 2
      %v322 = vmax.f32 %v320, %v321
      %v323 = vrot.slane %v322, 1
      %v324 = vmax.f32 %v322, %v323
      %325 = vst.msk [vmem:[%s147 + $0x11] sm:$0x1] %vm173, %v324
      %v326 = vsel %vm175, %v316, -inf
      %v327 = vrot.slane %v326, 4
      %v328 = vmax.f32 %v326, %v327
      %v329 = vrot.slane %v328, 2
      %v330 = vmax.f32 %v328, %v329
      %v331 = vrot.slane %v330, 1
      %v332 = vmax.f32 %v330, %v331
      %333 = vst.msk [vmem:[%s147 + $0x12] sm:$0x1] %vm173, %v332
      %v334 = vsel %vm165, %v317, -inf
      %v335 = vrot.slane %v334, 4
      %v336 = vmax.f32 %v334, %v335
      %v337 = vrot.slane %v336, 2
      %v338 = vmax.f32 %v336, %v337
      %v339 = vrot.slane %v338, 1
      %v340 = vmax.f32 %v338, %v339
      %341 = vst.msk [vmem:[%s147 + $0x13] sm:$0x1] %vm173, %v340
      %v342 = vsel %vm175, %v317, -inf
      %v343 = vrot.slane %v342, 4
      %v344 = vmax.f32 %v342, %v343
      %v345 = vrot.slane %v344, 2
      %v346 = vmax.f32 %v344, %v345
      %v347 = vrot.slane %v346, 1
      %v348 = vmax.f32 %v346, %v347
      %349 = vst.msk [vmem:[%s147 + $0x14] sm:$0x1] %vm173, %v348
      %v350 = vld [vmem:[%s147 + $0x5] sm:$0x1]
      %v351 = vld [vmem:[%s147 + $0x6] sm:$0x1]
      %v352 = vmax.f32 %v350, %v351
      %v353 = vld [vmem:[%s147 + $0x7] sm:$0x1]
      %v354 = vmax.f32 %v352, %v353
      %v355 = vld [vmem:[%s147 + $0x8] sm:$0x1]
      %v356 = vmax.f32 %v354, %v355
      %v357 = vld [vmem:[%s147 + $0x9] sm:$0x1]
      %v358 = vmax.f32 %v356, %v357
      %v359 = vld [vmem:[%s147 + $0xa] sm:$0x1]
      %v360 = vmax.f32 %v358, %v359
      %v361 = vld [vmem:[%s147 + $0xb] sm:$0x1]
      %v362 = vmax.f32 %v360, %v361
      %v363 = vld [vmem:[%s147 + $0xc] sm:$0x1]
      %v364 = vmax.f32 %v362, %v363
      %v365 = vld [vmem:[%s147 + $0xd] sm:$0x1]
      %v366 = vmax.f32 %v364, %v365
      %v367 = vld [vmem:[%s147 + $0xe] sm:$0x1]
      %v368 = vmax.f32 %v366, %v367
      %v369 = vld [vmem:[%s147 + $0xf] sm:$0x1]
      %v370 = vmax.f32 %v368, %v369
      %v371 = vld [vmem:[%s147 + $0x10] sm:$0x1]
      %v372 = vmax.f32 %v370, %v371
      %v373 = vld [vmem:[%s147 + $0x11] sm:$0x1]
      %v374 = vmax.f32 %v372, %v373
      %v375 = vld [vmem:[%s147 + $0x12] sm:$0x1]
      %v376 = vmax.f32 %v374, %v375
      %v377 = vld [vmem:[%s147 + $0x13] sm:$0x1]
      %v378 = vmax.f32 %v376, %v377
      %v379 = vld [vmem:[%s147 + $0x14] sm:$0x1]
      %v380 = vmax.f32 %v378, %v379
      %381 = vst.msk [vmem:[%s147] sm:$0x1] %vm173, %v380
      %v382 = vld [vmem:[%s147 + $0x5] sm:$0x1]
      %v383 = vld [vmem:[%s147 + $0x6] sm:$0x1]
      %v384 = vmax.f32 %v382, %v383
      %v385 = vld [vmem:[%s147 + $0x9] sm:$0x1]
      %v386 = vmax.f32 %v384, %v385
      %v387 = vld [vmem:[%s147 + $0xa] sm:$0x1]
      %v388 = vmax.f32 %v386, %v387
      %389 = vst.msk [vmem:[%s147 + $0x1] sm:$0x1] %vm173, %v388
      %v390 = vld [vmem:[%s147 + $0x7] sm:$0x1]
      %v391 = vld [vmem:[%s147 + $0x8] sm:$0x1]
      %v392 = vmax.f32 %v390, %v391
      %v393 = vld [vmem:[%s147 + $0xb] sm:$0x1]
      %v394 = vmax.f32 %v392, %v393
      %v395 = vld [vmem:[%s147 + $0xc] sm:$0x1]
      %v396 = vmax.f32 %v394, %v395
      %397 = vst.msk [vmem:[%s147 + $0x2] sm:$0x1] %vm173, %v396
      %v398 = vld [vmem:[%s147 + $0xd] sm:$0x1]
      %v399 = vld [vmem:[%s147 + $0xe] sm:$0x1]
      %v400 = vmax.f32 %v398, %v399
      %v401 = vld [vmem:[%s147 + $0x11] sm:$0x1]
      %v402 = vmax.f32 %v400, %v401
      %v403 = vld [vmem:[%s147 + $0x12] sm:$0x1]
      %v404 = vmax.f32 %v402, %v403
      %405 = vst.msk [vmem:[%s147 + $0x3] sm:$0x1] %vm173, %v404
      %v406 = vld [vmem:[%s147 + $0xf] sm:$0x1]
      %v407 = vld [vmem:[%s147 + $0x10] sm:$0x1]
      %v408 = vmax.f32 %v406, %v407
      %v409 = vld [vmem:[%s147 + $0x13] sm:$0x1]
      %v410 = vmax.f32 %v408, %v409
      %v411 = vld [vmem:[%s147 + $0x14] sm:$0x1]
      %v412 = vmax.f32 %v410, %v411
      %413 = vst.msk [vmem:[%s147 + $0x4] sm:$0x1] %vm173, %v412
      %p414 = scmp.lt.s32.totalorder %s16, 1
      %s415 = scalar_select %p414, %s16, 1
      %p416 = scmp.lt.s32.totalorder %s17, 0
      %s417 = scalar_select %p416, %s17, 0
      %s418 = smul.addr %s415, 3
      %s419 = sadd.s32 %s417, %s418
      %s420 = smul.addr %s419, 8
      %s421 = scalar_lea.vmem %s1, %s420
      // Predicated region
      $region25: #{tpu_custom_call.1} parent=23 // pred_check
        %p422 = pneg %p72
      $region26: #{tpu_custom_call.1} parent=23 // pred_check_branch
        %424 = sbr.rel (%p422) target = $region28
      $region27: #{tpu_custom_call.1} parent=23 // pred_region
        _
      $region28: #{tpu_custom_call.1} parent=23 // pred_fallthru
        _
    $region24: #{tpu_custom_call.1} parent=5 // pred_fallthru
      _
    %p425 = scmp.le.s32.totalorder 2, %s7
    // Predicated region
    $region29: #{tpu_custom_call.1} parent=5 // pred_check
      %p426 = pneg %p425
    $region30: #{tpu_custom_call.1} parent=5 // pred_check_branch
      %428 = sbr.rel (%p426) target = $region32
    $region31: #{tpu_custom_call.1} parent=5 // pred_region
      %s429 = ssub.s32 %s7, 2
      // Predicated region
      $region33: #{tpu_custom_call.1} parent=31 // pred_check
        %p430 = pneg %p78
      $region34: #{tpu_custom_call.1} parent=31 // pred_check_branch
        %432 = sbr.rel (%p430) target = $region36
      $region35: #{tpu_custom_call.1} parent=31 // pred_region
        %p433 = scmp.lt.s32.totalorder %s18, 1
        %s434 = scalar_select %p433, %s18, 1
        %p435 = scmp.lt.s32.totalorder %s19, 0
        %s436 = scalar_select %p435, %s19, 0
        %s437 = smul.addr %s434, 3
        %s438 = sadd.s32 %s436, %s437
        %s439 = smul.addr %s438, 8
        %s440 = scalar_lea.vmem %s1, %s439
      $region36: #{tpu_custom_call.1} parent=31 // pred_fallthru
        _
    $region32: #{tpu_custom_call.1} parent=5 // pred_fallthru
      _
  $region6: #{tpu_custom_call.1} parent=0 // loop_footer
    %s11 = sadd.s32 1, %s7
  $region7: #{tpu_custom_call.1} parent=0 // loop_footer_branch
    %6 = sbr.rel target = $region3
  $region8: #{tpu_custom_call.1} parent=0 // loop_exit
    _

</llo_original>
